<compile_context>
chip_gen: v7x
topology: tpu7x:2x2x1
jax: 0.10.0
libtpu: 0.0.40
codegen_flags: <defaults>
</compile_context>

<pallas_src>
import functools

import jax
import jax.numpy as jnp
from jax.experimental import pallas as pl
from jax.experimental.pallas import tpu as pltpu


# ------------------------------------------------------------------ helpers

def _gelu_tanh(x):
    # tanh-approximation GELU (f32 in, f32 out)
    c = 0.7978845608028654  # sqrt(2/pi)
    return 0.5 * x * (1.0 + jnp.tanh(c * (x + 0.044715 * x * x * x)))


# ------------------------------------------------------------------ fused kernel

def _gemini_mlp_kernel(x_ref, w_ref, b_ref, wo_ref, bo_ref, o_ref):
    # x_ref : (Bt, F)     bf16   activation tile
    # w_ref : (L, F, F)   bf16   stacked MLP layer weights (VMEM-resident)
    # b_ref : (L, 1, F)   f32    stacked MLP layer biases
    # wo_ref: (F, Fo)     bf16   output projection weight
    # bo_ref: (1, Fo)     f32    output projection bias
    # o_ref : (Bt, Fo)    f32
    h = x_ref[...]                                   # (Bt, F) bf16
    num_layers = w_ref.shape[0]
    for l in range(num_layers):                      # static unroll; weights stay in VMEM
        y = jnp.dot(h, w_ref[l], preferred_element_type=jnp.float32) + b_ref[l]
        h = _gelu_tanh(y).astype(jnp.bfloat16)       # GELU in f32, back to bf16 for MXU
    out = jnp.dot(h, wo_ref[...], preferred_element_type=jnp.float32) + bo_ref[...]
    o_ref[...] = out.astype(o_ref.dtype)


@functools.partial(jax.jit, static_argnames=("block_rows",))
def gemini_mlp_forward(x, params, block_rows=None):
    B, F = x.shape
    L = params["w_mlp"].shape[0]
    Fo = params["w_out"].shape[1]

    if block_rows is None or block_rows >= B:
        block_rows = B                               # single fused block at small sizes
    assert B % block_rows == 0
    grid = (B // block_rows,)

    return pl.pallas_call(
        _gemini_mlp_kernel,
        out_shape=jax.ShapeDtypeStruct((B, Fo), jnp.float32),
        grid=grid,
        in_specs=[
            pl.BlockSpec((block_rows, F), lambda i: (i, 0)),
            pl.BlockSpec((L, F, F), lambda i: (0, 0, 0)),
            pl.BlockSpec((L, 1, F), lambda i: (0, 0, 0)),
            pl.BlockSpec((F, Fo), lambda i: (0, 0)),
            pl.BlockSpec((1, Fo), lambda i: (0, 0)),
        ],
        out_specs=pl.BlockSpec((block_rows, Fo), lambda i: (i, 0)),
        compiler_params=pltpu.CompilerParams(dimension_semantics=("parallel",)),
    )(x.astype(jnp.bfloat16), params["w_mlp"], params["b_mlp"],
      params["w_out"], params["b_out"])


# ------------------------------------------------------------------ params + reference

def init_params(key, input_size, output_size, num_layers):
    ks = jax.random.split(key, 2 * num_layers + 2)
    w_mlp = jnp.stack([
        jax.random.normal(ks[2 * l], (input_size, input_size), jnp.float32)
        / jnp.sqrt(input_size)
        for l in range(num_layers)
    ]).astype(jnp.bfloat16)
    b_mlp = jnp.stack([
        0.01 * jax.random.normal(ks[2 * l + 1], (1, input_size), jnp.float32)
        for l in range(num_layers)
    ])
    w_out = (jax.random.normal(ks[-2], (input_size, output_size), jnp.float32)
             / jnp.sqrt(input_size)).astype(jnp.bfloat16)
    b_out = 0.01 * jax.random.normal(ks[-1], (1, output_size), jnp.float32)
    return {"w_mlp": w_mlp, "b_mlp": b_mlp, "w_out": w_out, "b_out": b_out}


def reference_forward(x, params):
    # pure-JAX reference following the same bf16/f32 dtype path
    h = x.astype(jnp.bfloat16)
    for l in range(params["w_mlp"].shape[0]):
        y = (jnp.dot(h, params["w_mlp"][l], preferred_element_type=jnp.float32)
             + params["b_mlp"][l])
        h = _gelu_tanh(y).astype(jnp.bfloat16)
    return (jnp.dot(h, params["w_out"], preferred_element_type=jnp.float32)
            + params["b_out"])


# ------------------------------------------------------------------ main

if __name__ == "__main__":
    B = 16            # batch (sublane axis)
    F_IN = 128        # input_size / hidden feature size (lane axis)
    F_OUT = 128       # output_size (lane-dense output)
    NUM_LAYERS = 3    # GeminiMLP default num_layers

    key = jax.random.PRNGKey(0)
    k_x, k_p = jax.random.split(key, 2)

    x = jax.random.normal(k_x, (B, F_IN), jnp.float32)
    params = init_params(k_p, F_IN, F_OUT, NUM_LAYERS)

    out = gemini_mlp_forward(x, params)
    out = jax.block_until_ready(out)

    assert out.shape == (B, F_OUT)
    assert bool(jnp.all(jnp.isfinite(out)))

    ref = jax.block_until_ready(reference_forward(x, params))
    assert bool(jnp.allclose(out, ref, atol=5e-2, rtol=5e-2))

    print("KERNEL_OK")
</pallas_src>

<mosaic_0001>
module attributes {stable_mosaic.version = 11 : i64} {
  func.func @_gemini_mlp_kernel(%arg0: i32, %arg1: memref<16x128xbf16, #tpu.memory_space<vmem>>, %arg2: memref<3x128x128xbf16, #tpu.memory_space<vmem>>, %arg3: memref<3x1x128xf32, #tpu.memory_space<vmem>>, %arg4: memref<128x128xbf16, #tpu.memory_space<vmem>>, %arg5: memref<1x128xf32, #tpu.memory_space<vmem>>, %arg6: memref<16x128xf32, #tpu.memory_space<vmem>>) attributes {dimension_semantics = [#tpu.dimension_semantics<parallel>], iteration_bounds = array<i64: 1>, scalar_prefetch = 0 : i64, scratch_operands = 0 : i64, tpu.core_type = #tpu.core_type<tc>, window_params = [{transform_indices = @transform_0, window_bounds = array<i64: 16, 128>}, {pipeline_mode = #tpu.pipeline_mode<synchronous>, transform_indices = @transform_1, window_bounds = array<i64: 3, 128, 128>}, {pipeline_mode = #tpu.pipeline_mode<synchronous>, transform_indices = @transform_2, window_bounds = array<i64: 3, 1, 128>}, {pipeline_mode = #tpu.pipeline_mode<synchronous>, transform_indices = @transform_3, window_bounds = array<i64: 128, 128>}, {pipeline_mode = #tpu.pipeline_mode<synchronous>, transform_indices = @transform_4, window_bounds = array<i64: 1, 128>}, {transform_indices = @transform_5, window_bounds = array<i64: 16, 128>}]} {
    %c0 = arith.constant 0 : index
    %c0_0 = arith.constant 0 : index
    %0 = vector.load %arg1[%c0, %c0_0] : memref<16x128xbf16, #tpu.memory_space<vmem>>, vector<16x128xbf16>
    %c0_1 = arith.constant 0 : index
    %c0_2 = arith.constant 0 : index
    %c0_3 = arith.constant 0 : index
    %1 = vector.load %arg2[%c0_1, %c0_2, %c0_3] : memref<3x128x128xbf16, #tpu.memory_space<vmem>>, vector<1x128x128xbf16>
    %2 = vector.shape_cast %1 : vector<1x128x128xbf16> to vector<128x128xbf16>
    %cst = arith.constant dense<0.000000e+00> : vector<16x128xf32>
    %3 = tpu.matmul %0, %2, %cst {dimension_numbers = #tpu.dot_dimension_numbers<[1], [0], [0], [1], [0, 0, 1, 1], [], []>} : vector<16x128xbf16>, vector<128x128xbf16>, vector<16x128xf32> -> vector<16x128xf32>
    %c0_4 = arith.constant 0 : index
    %c0_5 = arith.constant 0 : index
    %c0_6 = arith.constant 0 : index
    %4 = vector.load %arg3[%c0_4, %c0_5, %c0_6] : memref<3x1x128xf32, #tpu.memory_space<vmem>>, vector<1x1x128xf32>
    %5 = vector.shape_cast %4 : vector<1x1x128xf32> to vector<1x128xf32>
    %6 = vector.broadcast %5 : vector<1x128xf32> to vector<16x128xf32>
    %7 = arith.addf %3, %6 : vector<16x128xf32>
    %cst_7 = arith.constant 5.000000e-01 : f32
    %8 = vector.broadcast %cst_7 : f32 to vector<16x128xf32>
    %9 = arith.mulf %8, %7 : vector<16x128xf32>
    %cst_8 = arith.constant 4.471500e-02 : f32
    %10 = vector.broadcast %cst_8 : f32 to vector<16x128xf32>
    %11 = arith.mulf %10, %7 : vector<16x128xf32>
    %12 = arith.mulf %11, %7 : vector<16x128xf32>
    %13 = arith.mulf %12, %7 : vector<16x128xf32>
    %14 = arith.addf %7, %13 : vector<16x128xf32>
    %cst_9 = arith.constant 0.797884583 : f32
    %15 = vector.broadcast %cst_9 : f32 to vector<16x128xf32>
    %16 = arith.mulf %15, %14 : vector<16x128xf32>
    %17 = math.tanh %16 : vector<16x128xf32>
    %cst_10 = arith.constant 1.000000e+00 : f32
    %18 = vector.broadcast %cst_10 : f32 to vector<16x128xf32>
    %19 = arith.addf %18, %17 : vector<16x128xf32>
    %20 = arith.mulf %9, %19 : vector<16x128xf32>
    %21 = arith.truncf %20 : vector<16x128xf32> to vector<16x128xbf16>
    %c1 = arith.constant 1 : index
    %c0_11 = arith.constant 0 : index
    %c0_12 = arith.constant 0 : index
    %22 = vector.load %arg2[%c1, %c0_11, %c0_12] : memref<3x128x128xbf16, #tpu.memory_space<vmem>>, vector<1x128x128xbf16>
    %23 = vector.shape_cast %22 : vector<1x128x128xbf16> to vector<128x128xbf16>
    %cst_13 = arith.constant dense<0.000000e+00> : vector<16x128xf32>
    %24 = tpu.matmul %21, %23, %cst_13 {dimension_numbers = #tpu.dot_dimension_numbers<[1], [0], [0], [1], [0, 0, 1, 1], [], []>} : vector<16x128xbf16>, vector<128x128xbf16>, vector<16x128xf32> -> vector<16x128xf32>
    %c1_14 = arith.constant 1 : index
    %c0_15 = arith.constant 0 : index
    %c0_16 = arith.constant 0 : index
    %25 = vector.load %arg3[%c1_14, %c0_15, %c0_16] : memref<3x1x128xf32, #tpu.memory_space<vmem>>, vector<1x1x128xf32>
    %26 = vector.shape_cast %25 : vector<1x1x128xf32> to vector<1x128xf32>
    %27 = vector.broadcast %26 : vector<1x128xf32> to vector<16x128xf32>
    %28 = arith.addf %24, %27 : vector<16x128xf32>
    %cst_17 = arith.constant 5.000000e-01 : f32
    %29 = vector.broadcast %cst_17 : f32 to vector<16x128xf32>
    %30 = arith.mulf %29, %28 : vector<16x128xf32>
    %cst_18 = arith.constant 4.471500e-02 : f32
    %31 = vector.broadcast %cst_18 : f32 to vector<16x128xf32>
    %32 = arith.mulf %31, %28 : vector<16x128xf32>
    %33 = arith.mulf %32, %28 : vector<16x128xf32>
    %34 = arith.mulf %33, %28 : vector<16x128xf32>
    %35 = arith.addf %28, %34 : vector<16x128xf32>
    %cst_19 = arith.constant 0.797884583 : f32
    %36 = vector.broadcast %cst_19 : f32 to vector<16x128xf32>
    %37 = arith.mulf %36, %35 : vector<16x128xf32>
    %38 = math.tanh %37 : vector<16x128xf32>
    %cst_20 = arith.constant 1.000000e+00 : f32
    %39 = vector.broadcast %cst_20 : f32 to vector<16x128xf32>
    %40 = arith.addf %39, %38 : vector<16x128xf32>
    %41 = arith.mulf %30, %40 : vector<16x128xf32>
    %42 = arith.truncf %41 : vector<16x128xf32> to vector<16x128xbf16>
    %c2 = arith.constant 2 : index
    %c0_21 = arith.constant 0 : index
    %c0_22 = arith.constant 0 : index
    %43 = vector.load %arg2[%c2, %c0_21, %c0_22] : memref<3x128x128xbf16, #tpu.memory_space<vmem>>, vector<1x128x128xbf16>
    %44 = vector.shape_cast %43 : vector<1x128x128xbf16> to vector<128x128xbf16>
    %cst_23 = arith.constant dense<0.000000e+00> : vector<16x128xf32>
    %45 = tpu.matmul %42, %44, %cst_23 {dimension_numbers = #tpu.dot_dimension_numbers<[1], [0], [0], [1], [0, 0, 1, 1], [], []>} : vector<16x128xbf16>, vector<128x128xbf16>, vector<16x128xf32> -> vector<16x128xf32>
    %c2_24 = arith.constant 2 : index
    %c0_25 = arith.constant 0 : index
    %c0_26 = arith.constant 0 : index
    %46 = vector.load %arg3[%c2_24, %c0_25, %c0_26] : memref<3x1x128xf32, #tpu.memory_space<vmem>>, vector<1x1x128xf32>
    %47 = vector.shape_cast %46 : vector<1x1x128xf32> to vector<1x128xf32>
    %48 = vector.broadcast %47 : vector<1x128xf32> to vector<16x128xf32>
    %49 = arith.addf %45, %48 : vector<16x128xf32>
    %cst_27 = arith.constant 5.000000e-01 : f32
    %50 = vector.broadcast %cst_27 : f32 to vector<16x128xf32>
    %51 = arith.mulf %50, %49 : vector<16x128xf32>
    %cst_28 = arith.constant 4.471500e-02 : f32
    %52 = vector.broadcast %cst_28 : f32 to vector<16x128xf32>
    %53 = arith.mulf %52, %49 : vector<16x128xf32>
    %54 = arith.mulf %53, %49 : vector<16x128xf32>
    %55 = arith.mulf %54, %49 : vector<16x128xf32>
    %56 = arith.addf %49, %55 : vector<16x128xf32>
    %cst_29 = arith.constant 0.797884583 : f32
    %57 = vector.broadcast %cst_29 : f32 to vector<16x128xf32>
    %58 = arith.mulf %57, %56 : vector<16x128xf32>
    %59 = math.tanh %58 : vector<16x128xf32>
    %cst_30 = arith.constant 1.000000e+00 : f32
    %60 = vector.broadcast %cst_30 : f32 to vector<16x128xf32>
    %61 = arith.addf %60, %59 : vector<16x128xf32>
    %62 = arith.mulf %51, %61 : vector<16x128xf32>
    %63 = arith.truncf %62 : vector<16x128xf32> to vector<16x128xbf16>
    %c0_31 = arith.constant 0 : index
    %c0_32 = arith.constant 0 : index
    %64 = vector.load %arg4[%c0_31, %c0_32] : memref<128x128xbf16, #tpu.memory_space<vmem>>, vector<128x128xbf16>
    %cst_33 = arith.constant dense<0.000000e+00> : vector<16x128xf32>
    %65 = tpu.matmul %63, %64, %cst_33 {dimension_numbers = #tpu.dot_dimension_numbers<[1], [0], [0], [1], [0, 0, 1, 1], [], []>} : vector<16x128xbf16>, vector<128x128xbf16>, vector<16x128xf32> -> vector<16x128xf32>
    %c0_34 = arith.constant 0 : index
    %c0_35 = arith.constant 0 : index
    %66 = vector.load %arg5[%c0_34, %c0_35] : memref<1x128xf32, #tpu.memory_space<vmem>>, vector<1x128xf32>
    %67 = vector.broadcast %66 : vector<1x128xf32> to vector<16x128xf32>
    %68 = arith.addf %65, %67 : vector<16x128xf32>
    %c0_36 = arith.constant 0 : index
    %c0_37 = arith.constant 0 : index
    %69 = vector.load %arg6[%c0_36, %c0_37] : memref<16x128xf32, #tpu.memory_space<vmem>>, vector<16x128xf32>
    tpu.vector_store %arg6[%c0_36, %c0_37], %68 {strides = array<i32>} : memref<16x128xf32, #tpu.memory_space<vmem>>, vector<16x128xf32>,
    return
  }
  func.func @transform_0(%arg0: i32) -> (i32, i32) {
    %c0_i32 = arith.constant 0 : i32
    %c0_i32_0 = arith.constant 0 : i32
    return %arg0, %c0_i32 : i32, i32
  }
  func.func @transform_1(%arg0: i32) -> (i32, i32, i32) {
    %c0_i32 = arith.constant 0 : i32
    %c0_i32_0 = arith.constant 0 : i32
    %c0_i32_1 = arith.constant 0 : i32
    %c0_i32_2 = arith.constant 0 : i32
    return %c0_i32, %c0_i32_0, %c0_i32_1 : i32, i32, i32
  }
  func.func @transform_2(%arg0: i32) -> (i32, i32, i32) {
    %c0_i32 = arith.constant 0 : i32
    %c0_i32_0 = arith.constant 0 : i32
    %c0_i32_1 = arith.constant 0 : i32
    %c0_i32_2 = arith.constant 0 : i32
    return %c0_i32, %c0_i32_0, %c0_i32_1 : i32, i32, i32
  }
  func.func @transform_3(%arg0: i32) -> (i32, i32) {
    %c0_i32 = arith.constant 0 : i32
    %c0_i32_0 = arith.constant 0 : i32
    %c0_i32_1 = arith.constant 0 : i32
    return %c0_i32, %c0_i32_0 : i32, i32
  }
  func.func @transform_4(%arg0: i32) -> (i32, i32) {
    %c0_i32 = arith.constant 0 : i32
    %c0_i32_0 = arith.constant 0 : i32
    %c0_i32_1 = arith.constant 0 : i32
    return %c0_i32, %c0_i32_0 : i32, i32
  }
  func.func @transform_5(%arg0: i32) -> (i32, i32) {
    %c0_i32 = arith.constant 0 : i32
    %c0_i32_0 = arith.constant 0 : i32
    return %arg0, %c0_i32 : i32, i32
  }
}

</mosaic_0001>

<llo_original>
// kernel: gemini_mlp_forward.1
$region0: #{gemini_mlp_forward.1}
  #allocation0 [shape = 'u32[]', space=smem, size = 0x4, offset = 0x4, fixed_abs, tag = 'smem constant byte address 0x4 - core index']
  #allocation1 [shape = 'u32[144,128]{1,0:T(1,128)}', space=vmem, size = 0x12000, scoped, tag = 'internal scratch']
  %s0 = inlined_call_operand.vmem [shape: bf16[16,128], index: 0, kind: input, shape index: {}]
  %s1 = inlined_call_operand.hbm [shape: bf16[3,128,128], index: 1, kind: input, shape index: {}]
  %s2 = inlined_call_operand.vmem [shape: f32[3,1,128], index: 2, kind: input, shape index: {}]
  %s3 = inlined_call_operand.hbm [shape: bf16[128,128], index: 3, kind: input, shape index: {}]
  %s4 = inlined_call_operand.vmem [shape: f32[1,128], index: 4, kind: input, shape index: {}]
  %s5 = inlined_call_operand.hbm [shape: f32[16,128], index: 5, kind: output, shape index: {}]
  %s6 = sld [smem:[#allocation0]]
  $region38: #{gemini_mlp_forward.1} parent=0
    _
  %s8 = ssub.s32 1, %s6
  %s9 = scalar_select 0, %s8, %s6
  $region1: #{gemini_mlp_forward.1} parent=0
    #allocation2 [shape = 'u8[98304]{0}', space=vmem, size = 0x18000, scoped, tag = 'input window, operand 1, single buffered']
    #allocation3 [shape = 's32[1]{0}', space=sflag, size = 0x4, scoped, tag = 'scoped memory for gemini_mlp_forward.1']
    #allocation4 [shape = 's32[1]{0}', space=sflag, size = 0x4, scoped, tag = 'scoped memory for gemini_mlp_forward.1']
    #allocation5 [shape = 'u8[32768]{0}', space=vmem, size = 0x8000, scoped, tag = 'input window, operand 3, single buffered']
    #allocation6 [shape = 's32[1]{0}', space=sflag, size = 0x4, scoped, tag = 'scoped memory for gemini_mlp_forward.1']
    #allocation7 [shape = 'u8[8192]{0}', space=vmem, size = 0x2000, scoped, tag = 'output window, operand 0, single buffered']
    %10 = vsyncpa [#allocation3], 0
    %11 = vsyncpa [#allocation6], 0
    %12 = vsyncpa [#allocation4], 0
    // Predicated region
    $region2: #{gemini_mlp_forward.1} parent=1 // pred_check
      _
    $region3: #{gemini_mlp_forward.1} parent=1 // pred_check_branch
      %14 = sbr.rel (0) target = $region5
    $region4: #{gemini_mlp_forward.1} parent=1 // pred_region
      _
    $region5: #{gemini_mlp_forward.1} parent=1 // pred_fallthru
      _
    // Predicated region
    $region6: #{gemini_mlp_forward.1} parent=1 // pred_check
      _
    $region7: #{gemini_mlp_forward.1} parent=1 // pred_check_branch
      %16 = sbr.rel (0) target = $region9
    $region8: #{gemini_mlp_forward.1} parent=1 // pred_region
      %s18 = ssub.s32 3072, 3072
      %19 = vsyncadd [#allocation3], %s18
      %s20 = sshll.u32 [#allocation2], 4
      %s21 = int_to_ptr.vmem [resolvable:$true] %s20
      %26 = dma.hbm_to_vmem [thread:$0]  %s1, 3072, %s21, [#allocation3], 64, 64, 4
    $region9: #{gemini_mlp_forward.1} parent=1 // pred_fallthru
      _
    // Predicated region
    $region10: #{gemini_mlp_forward.1} parent=1 // pred_check
      _
    $region11: #{gemini_mlp_forward.1} parent=1 // pred_check_branch
      %28 = sbr.rel (0) target = $region13
    $region12: #{gemini_mlp_forward.1} parent=1 // pred_region
      _
    $region13: #{gemini_mlp_forward.1} parent=1 // pred_fallthru
      _
    // Predicated region
    $region14: #{gemini_mlp_forward.1} parent=1 // pred_check
      _
    $region15: #{gemini_mlp_forward.1} parent=1 // pred_check_branch
      %30 = sbr.rel (0) target = $region17
    $region16: #{gemini_mlp_forward.1} parent=1 // pred_region
      %s32 = ssub.s32 1024, 1024
      %33 = vsyncadd [#allocation6], %s32
      %s34 = sshll.u32 [#allocation5], 4
      %s35 = int_to_ptr.vmem [resolvable:$true] %s34
      %40 = dma.hbm_to_vmem [thread:$0]  %s3, 1024, %s35, [#allocation6], 64, 64, 4
    $region17: #{gemini_mlp_forward.1} parent=1 // pred_fallthru
      _
    // Predicated region
    $region18: #{gemini_mlp_forward.1} parent=1 // pred_check
      _
    $region19: #{gemini_mlp_forward.1} parent=1 // pred_check_branch
      %42 = sbr.rel (0) target = $region21
    $region20: #{gemini_mlp_forward.1} parent=1 // pred_region
      _
    $region21: #{gemini_mlp_forward.1} parent=1 // pred_fallthru
      _
    // Predicated region
    $region22: #{gemini_mlp_forward.1} parent=1 // pred_check
      _
    $region23: #{gemini_mlp_forward.1} parent=1 // pred_check_branch
      %44 = sbr.rel (0) target = $region25
    $region24: #{gemini_mlp_forward.1} parent=1 // pred_region
      %45 = dma.done [#allocation3], 3072
    $region25: #{gemini_mlp_forward.1} parent=1 // pred_fallthru
      _
    // Predicated region
    $region26: #{gemini_mlp_forward.1} parent=1 // pred_check
      _
    $region27: #{gemini_mlp_forward.1} parent=1 // pred_check_branch
      %47 = sbr.rel (0) target = $region29
    $region28: #{gemini_mlp_forward.1} parent=1 // pred_region
      %48 = dma.done [#allocation6], 1024
    $region29: #{gemini_mlp_forward.1} parent=1 // pred_fallthru
      _
    %v50 = vld [vmem:[%s0] sm:$0xf]
    %v51 = vld [vmem:[%s0 + $0x4] sm:$0xf]
    %v52 = vld [vmem:[#allocation2] sm:$0xf]
    %v53 = vld [vmem:[#allocation2 + $0x4] sm:$0xf]
    %v54 = vld [vmem:[#allocation2 + $0x8] sm:$0xf]
    %v55 = vld [vmem:[#allocation2 + $0xc] sm:$0xf]
    %v56 = vld [vmem:[#allocation2 + $0x10] sm:$0xf]
    %v57 = vld [vmem:[#allocation2 + $0x14] sm:$0xf]
    %v58 = vld [vmem:[#allocation2 + $0x18] sm:$0xf]
    %v59 = vld [vmem:[#allocation2 + $0x1c] sm:$0xf]
    %v60 = vld [vmem:[#allocation2 + $0x20] sm:$0xf]
    %v61 = vld [vmem:[#allocation2 + $0x24] sm:$0xf]
    %v62 = vld [vmem:[#allocation2 + $0x28] sm:$0xf]
    %v63 = vld [vmem:[#allocation2 + $0x2c] sm:$0xf]
    %v64 = vld [vmem:[#allocation2 + $0x30] sm:$0xf]
    %v65 = vld [vmem:[#allocation2 + $0x34] sm:$0xf]
    %v66 = vld [vmem:[#allocation2 + $0x38] sm:$0xf]
    %v67 = vld [vmem:[#allocation2 + $0x3c] sm:$0xf]
    %v68 = vld [vmem:[%s2] sm:$0x1]
    %v70 = vlaneseq
    %v71 = vshrl.u32 %v70, 7
    %v72 = vsub.s32 0, %v71
    %v73 = vrot.slane %v68, %v72
    %v77 = vunpack.c.l.b16 %v50
    %v78 = vunpack.c.l.b16 %v51
    %v79 = vpack.c.b16 %v78, %v77
    %v97 = vunpack.c.l.b16 %v52
    %v98 = vunpack.c.l.b16 %v53
    %v99 = vunpack.c.l.b16 %v54
    %v100 = vunpack.c.l.b16 %v55
    %v101 = vunpack.c.l.b16 %v56
    %v102 = vunpack.c.l.b16 %v57
    %v103 = vunpack.c.l.b16 %v58
    %v104 = vunpack.c.l.b16 %v59
    %v105 = vunpack.c.l.b16 %v60
    %v106 = vunpack.c.l.b16 %v61
    %v107 = vunpack.c.l.b16 %v62
    %v108 = vunpack.c.l.b16 %v63
    %v109 = vunpack.c.l.b16 %v64
    %v110 = vunpack.c.l.b16 %v65
    %v111 = vunpack.c.l.b16 %v66
    %v112 = vunpack.c.l.b16 %v67
    %v113 = vpack.c.b16 %v98, %v97
    %v114 = vpack.c.b16 %v100, %v99
    %v115 = vpack.c.b16 %v102, %v101
    %v116 = vpack.c.b16 %v104, %v103
    %v117 = vpack.c.b16 %v106, %v105
    %v118 = vpack.c.b16 %v108, %v107
    %v119 = vpack.c.b16 %v110, %v109
    %v120 = vpack.c.b16 %v112, %v111
    %129 = vmatprep.subr.bf16.mxu0 0
    %130 = vmatpush1.bf16.msra.mxu0 %v113
    %131 = vmatprep.subr.bf16.mxu0 0
    %132 = vmatpush1.bf16.msra.mxu0 %v114
    %133 = vmatprep.subr.bf16.mxu0 0
    %134 = vmatpush1.bf16.msra.mxu0 %v115
    %135 = vmatprep.subr.bf16.mxu0 0
    %136 = vmatpush1.bf16.msra.mxu0 %v116
    %137 = vmatprep.subr.bf16.mxu0 0
    %138 = vmatpush1.bf16.msra.mxu0 %v117
    %139 = vmatprep.subr.bf16.mxu0 0
    %140 = vmatpush1.bf16.msra.mxu0 %v118
    %141 = vmatprep.subr.bf16.mxu0 0
    %142 = vmatpush1.bf16.msra.mxu0 %v119
    %143 = vmatprep.subr.bf16.mxu0 0
    %144 = vmatpush1.bf16.msra.mxu0 %v120
    %145 = vmatprep.subr.bf16.mxu0 0
    %146 = vmatpush1.bf16.msra.mxu0 0
    %147 = vmatprep.subr.bf16.mxu0 0
    %148 = vmatpush1.bf16.msra.mxu0 0
    %149 = vmatprep.subr.bf16.mxu0 0
    %150 = vmatpush1.bf16.msra.mxu0 0
    %151 = vmatprep.subr.bf16.mxu0 0
    %152 = vmatpush1.bf16.msra.mxu0 0
    %153 = vmatprep.subr.bf16.mxu0 0
    %154 = vmatpush1.bf16.msra.mxu0 0
    %155 = vmatprep.subr.bf16.mxu0 0
    %156 = vmatpush1.bf16.msra.mxu0 0
    %157 = vmatprep.subr.bf16.mxu0 0
    %158 = vmatpush1.bf16.msra.mxu0 0
    %159 = vmatprep.subr.bf16.mxu0 0
    %160 = vmatpush1.bf16.msra.mxu0 0
    %161 = vmatprep.mubr.bf16.mxu0 0
    %162 = vmatmul.mubr.bf16.gmra.mrb[0].mxu0 %v79
    %v163 = vpop.f32.mrb[0].mxu0
    %v164 = vadd.f32 %v73, %v163
    %v165 = vpop.f32.mrb[0].mxu0
    %v166 = vpop.f32.mrb[0].mxu0
    %v167 = vadd.f32 %v73, %v166
    %v168 = vpop.f32.mrb[0].mxu0
    %169 = vdwg.mxu0
    %v170 = vmul.f32 %v164, 0.5
    %v171 = vmul.f32 %v167, 0.5
    %v172 = vmul.f32 %v164, 0.044715
    %v173 = vmul.f32 %v167, 0.044715
    %v174 = vmul.f32 %v172, %v164
    %v175 = vmul.f32 %v173, %v167
    %v176 = vmul.f32 %v174, %v164
    %v177 = vmul.f32 %v175, %v167
    %v178 = vadd.f32 %v164, %v176
    %v179 = vadd.f32 %v167, %v177
    %v180 = vmul.f32 %v178, 0.7978846
    %v181 = vmul.f32 %v179, 0.7978846
    %v182 = vtanh.pop %v180
    %v183 = vtanh.pop %v181
    %v184 = vadd.f32 %v182, 1.0
    %v185 = vadd.f32 %v183, 1.0
    %v186 = vmul.f32 %v170, %v184
    %v187 = vmul.f32 %v171, %v185
    %v188 = vpack.c.bf16 %v187, %v186
    %s189 = scalar_lea.vmem [#allocation2], 64
    %v190 = vld [vmem:[%s189] sm:$0xf]
    %v191 = vld [vmem:[%s189 + $0x4] sm:$0xf]
    %v192 = vld [vmem:[%s189 + $0x8] sm:$0xf]
    %v193 = vld [vmem:[%s189 + $0xc] sm:$0xf]
    %v194 = vld [vmem:[%s189 + $0x10] sm:$0xf]
    %v195 = vld [vmem:[%s189 + $0x14] sm:$0xf]
    %v196 = vld [vmem:[%s189 + $0x18] sm:$0xf]
    %v197 = vld [vmem:[%s189 + $0x1c] sm:$0xf]
    %v198 = vld [vmem:[%s189 + $0x20] sm:$0xf]
    %v199 = vld [vmem:[%s189 + $0x24] sm:$0xf]
    %v200 = vld [vmem:[%s189 + $0x28] sm:$0xf]
    %v201 = vld [vmem:[%s189 + $0x2c] sm:$0xf]
    %v202 = vld [vmem:[%s189 + $0x30] sm:$0xf]
    %v203 = vld [vmem:[%s189 + $0x34] sm:$0xf]
    %v204 = vld [vmem:[%s189 + $0x38] sm:$0xf]
    %v205 = vld [vmem:[%s189 + $0x3c] sm:$0xf]
    %s206 = scalar_lea.vmem %s2, 1
    %v207 = vld [vmem:[%s206] sm:$0x1]
    %v209 = vlaneseq
    %v210 = vshrl.u32 %v209, 7
    %v211 = vsub.s32 0, %v210
    %v212 = vrot.slane %v207, %v211
    %v230 = vunpack.c.l.b16 %v190
    %v231 = vunpack.c.l.b16 %v191
    %v232 = vunpack.c.l.b16 %v192
    %v233 = vunpack.c.l.b16 %v193
    %v234 = vunpack.c.l.b16 %v194
    %v235 = vunpack.c.l.b16 %v195
    %v236 = vunpack.c.l.b16 %v196
    %v237 = vunpack.c.l.b16 %v197
    %v238 = vunpack.c.l.b16 %v198
    %v239 = vunpack.c.l.b16 %v199
    %v240 = vunpack.c.l.b16 %v200
    %v241 = vunpack.c.l.b16 %v201
    %v242 = vunpack.c.l.b16 %v202
    %v243 = vunpack.c.l.b16 %v203
    %v244 = vunpack.c.l.b16 %v204
    %v245 = vunpack.c.l.b16 %v205
    %v246 = vpack.c.b16 %v231, %v230
    %v247 = vpack.c.b16 %v233, %v232
    %v248 = vpack.c.b16 %v235, %v234
    %v249 = vpack.c.b16 %v237, %v236
    %v250 = vpack.c.b16 %v239, %v238
    %v251 = vpack.c.b16 %v241, %v240
    %v252 = vpack.c.b16 %v243, %v242
    %v253 = vpack.c.b16 %v245, %v244
    %262 = vmatprep.subr.bf16.mxu0 0
    %263 = vmatpush1.bf16.msra.mxu0 %v246
    %264 = vmatprep.subr.bf16.mxu0 0
    %265 = vmatpush1.bf16.msra.mxu0 %v247
    %266 = vmatprep.subr.bf16.mxu0 0
    %267 = vmatpush1.bf16.msra.mxu0 %v248
    %268 = vmatprep.subr.bf16.mxu0 0
    %269 = vmatpush1.bf16.msra.mxu0 %v249
    %270 = vmatprep.subr.bf16.mxu0 0
    %271 = vmatpush1.bf16.msra.mxu0 %v250
    %272 = vmatprep.subr.bf16.mxu0 0
    %273 = vmatpush1.bf16.msra.mxu0 %v251
    %274 = vmatprep.subr.bf16.mxu0 0
    %275 = vmatpush1.bf16.msra.mxu0 %v252
    %276 = vmatprep.subr.bf16.mxu0 0
    %277 = vmatpush1.bf16.msra.mxu0 %v253
    %278 = vmatprep.subr.bf16.mxu0 0
    %279 = vmatpush1.bf16.msra.mxu0 0
    %280 = vmatprep.subr.bf16.mxu0 0
    %281 = vmatpush1.bf16.msra.mxu0 0
    %282 = vmatprep.subr.bf16.mxu0 0
    %283 = vmatpush1.bf16.msra.mxu0 0
    %284 = vmatprep.subr.bf16.mxu0 0
    %285 = vmatpush1.bf16.msra.mxu0 0
    %286 = vmatprep.subr.bf16.mxu0 0
    %287 = vmatpush1.bf16.msra.mxu0 0
    %288 = vmatprep.subr.bf16.mxu0 0
    %289 = vmatpush1.bf16.msra.mxu0 0
    %290 = vmatprep.subr.bf16.mxu0 0
    %291 = vmatpush1.bf16.msra.mxu0 0
    %292 = vmatprep.subr.bf16.mxu0 0
    %293 = vmatpush1.bf16.msra.mxu0 0
    %294 = vmatprep.mubr.bf16.mxu0 0
    %295 = vmatmul.mubr.bf16.gmra.mrb[0].mxu0 %v188
    %v296 = vpop.f32.mrb[0].mxu0
    %v297 = vadd.f32 %v212, %v296
    %v298 = vpop.f32.mrb[0].mxu0
    %v299 = vpop.f32.mrb[0].mxu0
    %v300 = vadd.f32 %v212, %v299
    %v301 = vpop.f32.mrb[0].mxu0
    %302 = vdwg.mxu0
    %v303 = vmul.f32 %v297, 0.5
    %v304 = vmul.f32 %v300, 0.5
    %v305 = vmul.f32 %v297, 0.044715
    %v306 = vmul.f32 %v300, 0.044715
    %v307 = vmul.f32 %v305, %v297
    %v308 = vmul.f32 %v306, %v300
    %v309 = vmul.f32 %v307, %v297
    %v310 = vmul.f32 %v308, %v300
    %v311 = vadd.f32 %v297, %v309
    %v312 = vadd.f32 %v300, %v310
    %v313 = vmul.f32 %v311, 0.7978846
    %v314 = vmul.f32 %v312, 0.7978846
    %v315 = vtanh.pop %v313
    %v316 = vtanh.pop %v314
    %v317 = vadd.f32 %v315, 1.0
    %v318 = vadd.f32 %v316, 1.0
    %v319 = vmul.f32 %v303, %v317
    %v320 = vmul.f32 %v304, %v318
    %v321 = vpack.c.bf16 %v320, %v319
    %s322 = scalar_lea.vmem [#allocation2], 128
    %v323 = vld [vmem:[%s322] sm:$0xf]
    %v324 = vld [vmem:[%s322 + $0x4] sm:$0xf]
    %v325 = vld [vmem:[%s322 + $0x8] sm:$0xf]
    %v326 = vld [vmem:[%s322 + $0xc] sm:$0xf]
    %v327 = vld [vmem:[%s322 + $0x10] sm:$0xf]
    %v328 = vld [vmem:[%s322 + $0x14] sm:$0xf]
    %v329 = vld [vmem:[%s322 + $0x18] sm:$0xf]
    %v330 = vld [vmem:[%s322 + $0x1c] sm:$0xf]
    %v331 = vld [vmem:[%s322 + $0x20] sm:$0xf]
    %v332 = vld [vmem:[%s322 + $0x24] sm:$0xf]
    %v333 = vld [vmem:[%s322 + $0x28] sm:$0xf]
    %v334 = vld [vmem:[%s322 + $0x2c] sm:$0xf]
    %v335 = vld [vmem:[%s322 + $0x30] sm:$0xf]
    %v336 = vld [vmem:[%s322 + $0x34] sm:$0xf]
    %v337 = vld [vmem:[%s322 + $0x38] sm:$0xf]
    %v338 = vld [vmem:[%s322 + $0x3c] sm:$0xf]
    %s339 = scalar_lea.vmem %s2, 2
    %v340 = vld [vmem:[%s339] sm:$0x1]
    %v342 = vlaneseq
    %v343 = vshrl.u32 %v342, 7
    %v344 = vsub.s32 0, %v343
    %v345 = vrot.slane %v340, %v344
    %v363 = vunpack.c.l.b16 %v323
    %v364 = vunpack.c.l.b16 %v324
    %v365 = vunpack.c.l.b16 %v325
    %v366 = vunpack.c.l.b16 %v326
    %v367 = vunpack.c.l.b16 %v327
    %v368 = vunpack.c.l.b16 %v328
    %v369 = vunpack.c.l.b16 %v329
    %v370 = vunpack.c.l.b16 %v330
    %v371 = vunpack.c.l.b16 %v331
    %v372 = vunpack.c.l.b16 %v332
    %v373 = vunpack.c.l.b16 %v333
    %v374 = vunpack.c.l.b16 %v334
    %v375 = vunpack.c.l.b16 %v335
    %v376 = vunpack.c.l.b16 %v336
    %v377 = vunpack.c.l.b16 %v337
    %v378 = vunpack.c.l.b16 %v338
    %v379 = vpack.c.b16 %v364, %v363
    %v380 = vpack.c.b16 %v366, %v365
    %v381 = vpack.c.b16 %v368, %v367
    %v382 = vpack.c.b16 %v370, %v369
    %v383 = vpack.c.b16 %v372, %v371
    %v384 = vpack.c.b16 %v374, %v373
    %v385 = vpack.c.b16 %v376, %v375
    %v386 = vpack.c.b16 %v378, %v377
    %395 = vmatprep.subr.bf16.mxu0 0
    %396 = vmatpush1.bf16.msra.mxu0 %v379
    %397 = vmatprep.subr.bf16.mxu0 0
    %398 = vmatpush1.bf16.msra.mxu0 %v380
    %399 = vmatprep.subr.bf16.mxu0 0
    %400 = vmatpush1.bf16.msra.mxu0 %v381
    %401 = vmatprep.subr.bf16.mxu0 0
    %402 = vmatpush1.bf16.msra.mxu0 %v382
    %403 = vmatprep.subr.bf16.mxu0 0
    %404 = vmatpush1.bf16.msra.mxu0 %v383
    %405 = vmatprep.subr.bf16.mxu0 0
    %406 = vmatpush1.bf16.msra.mxu0 %v384
    %407 = vmatprep.subr.bf16.mxu0 0
    %408 = vmatpush1.bf16.msra.mxu0 %v385
    %409 = vmatprep.subr.bf16.mxu0 0
    %410 = vmatpush1.bf16.msra.mxu0 %v386
    %411 = vmatprep.subr.bf16.mxu0 0
    %412 = vmatpush1.bf16.msra.mxu0 0
    %413 = vmatprep.subr.bf16.mxu0 0
    %414 = vmatpush1.bf16.msra.mxu0 0
    %415 = vmatprep.subr.bf16.mxu0 0
    %416 = vmatpush1.bf16.msra.mxu0 0
    %417 = vmatprep.subr.bf16.mxu0 0
    %418 = vmatpush1.bf16.msra.mxu0 0
    %419 = vmatprep.subr.bf16.mxu0 0
    %420 = vmatpush1.bf16.msra.mxu0 0
    %421 = vmatprep.subr.bf16.mxu0 0
    %422 = vmatpush1.bf16.msra.mxu0 0
    %423 = vmatprep.subr.bf16.mxu0 0
    %424 = vmatpush1.bf16.msra.mxu0 0
    %425 = vmatprep.subr.bf16.mxu0 0
    %426 = vmatpush1.bf16.msra.mxu0 0
    %427 = vmatprep.mubr.bf16.mxu0 0
    %428 = vmatmul.mubr.bf16.gmra.mrb[0].mxu0 %v321
    %v429 = vpop.f32.mrb[0].mxu0
    %v430 = vadd.f32 %v345, %v429
    %v431 = vpop.f32.mrb[0].mxu0
    %v432 = vpop.f32.mrb[0].mxu0
    %v433 = vadd.f32 %v345, %v432
    %v434 = vpop.f32.mrb[0].mxu0
    %435 = vdwg.mxu0
    %v436 = vmul.f32 %v430, 0.5
    %v437 = vmul.f32 %v433, 0.5
    %v438 = vmul.f32 %v430, 0.044715
    %v439 = vmul.f32 %v433, 0.044715
    %v440 = vmul.f32 %v438, %v430
    %v441 = vmul.f32 %v439, %v433
    %v442 = vmul.f32 %v440, %v430
    %v443 = vmul.f32 %v441, %v433
    %v444 = vadd.f32 %v430, %v442
    %v445 = vadd.f32 %v433, %v443
    %v446 = vmul.f32 %v444, 0.7978846
    %v447 = vmul.f32 %v445, 0.7978846
    %v448 = vtanh.pop %v446
    %v449 = vtanh.pop %v447
    %v450 = vadd.f32 %v448, 1.0
    %v451 = vadd.f32 %v449, 1.0
    %v452 = vmul.f32 %v436, %v450
    %v453 = vmul.f32 %v437, %v451
    %v454 = vpack.c.bf16 %v453, %v452
    %v455 = vld [vmem:[#allocation5] sm:$0xf]
    %v456 = vld [vmem:[#allocation5 + $0x4] sm:$0xf]
    %v457 = vld [vmem:[#allocation5 + $0x8] sm:$0xf]
    %v458 = vld [vmem:[#allocation5 + $0xc] sm:$0xf]
    %v459 = vld [vmem:[#allocation5 + $0x10] sm:$0xf]
    %v460 = vld [vmem:[#allocation5 + $0x14] sm:$0xf]
    %v461 = vld [vmem:[#allocation5 + $0x18] sm:$0xf]
    %v462 = vld [vmem:[#allocation5 + $0x1c] sm:$0xf]
    %v463 = vld [vmem:[#allocation5 + $0x20] sm:$0xf]
    %v464 = vld [vmem:[#allocation5 + $0x24] sm:$0xf]
    %v465 = vld [vmem:[#allocation5 + $0x28] sm:$0xf]
    %v466 = vld [vmem:[#allocation5 + $0x2c] sm:$0xf]
    %v467 = vld [vmem:[#allocation5 + $0x30] sm:$0xf]
    %v468 = vld [vmem:[#allocation5 + $0x34] sm:$0xf]
    %v469 = vld [vmem:[#allocation5 + $0x38] sm:$0xf]
    %v470 = vld [vmem:[#allocation5 + $0x3c] sm:$0xf]
    %v471 = vld [vmem:[%s4] sm:$0x1]
    %v473 = vlaneseq
    %v474 = vshrl.u32 %v473, 7
    %v475 = vsub.s32 0, %v474
    %v476 = vrot.slane %v471, %v475
    %v494 = vunpack.c.l.b16 %v455
    %v495 = vunpack.c.l.b16 %v456
    %v496 = vunpack.c.l.b16 %v457
    %v497 = vunpack.c.l.b16 %v458
    %v498 = vunpack.c.l.b16 %v459
    %v499 = vunpack.c.l.b16 %v460
    %v500 = vunpack.c.l.b16 %v461
    %v501 = vunpack.c.l.b16 %v462
    %v502 = vunpack.c.l.b16 %v463
    %v503 = vunpack.c.l.b16 %v464
    %v504 = vunpack.c.l.b16 %v465
    %v505 = vunpack.c.l.b16 %v466
    %v506 = vunpack.c.l.b16 %v467
    %v507 = vunpack.c.l.b16 %v468
    %v508 = vunpack.c.l.b16 %v469
    %v509 = vunpack.c.l.b16 %v470
    %v510 = vpack.c.b16 %v495, %v494
    %v511 = vpack.c.b16 %v497, %v496
    %v512 = vpack.c.b16 %v499, %v498
    %v513 = vpack.c.b16 %v501, %v500
    %v514 = vpack.c.b16 %v503, %v502
    %v515 = vpack.c.b16 %v505, %v504
    %v516 = vpack.c.b16 %v507, %v506
    %v517 = vpack.c.b16 %v509, %v508
    %526 = vmatprep.subr.bf16.mxu0 0
    %527 = vmatpush1.bf16.msra.mxu0 %v510
    %528 = vmatprep.subr.bf16.mxu0 0
    %529 = vmatpush1.bf16.msra.mxu0 %v511
    %530 = vmatprep.subr.bf16.mxu0 0
    %531 = vmatpush1.bf16.msra.mxu0 %v512
    %532 = vmatprep.subr.bf16.mxu0 0
    %533 = vmatpush1.bf16.msra.mxu0 %v513
    %534 = vmatprep.subr.bf16.mxu0 0
    %535 = vmatpush1.bf16.msra.mxu0 %v514
    %536 = vmatprep.subr.bf16.mxu0 0
    %537 = vmatpush1.bf16.msra.mxu0 %v515
    %538 = vmatprep.subr.bf16.mxu0 0
    %539 = vmatpush1.bf16.msra.mxu0 %v516
    %540 = vmatprep.subr.bf16.mxu0 0
    %541 = vmatpush1.bf16.msra.mxu0 %v517
    %542 = vmatprep.subr.bf16.mxu0 0
    %543 = vmatpush1.bf16.msra.mxu0 0
    %544 = vmatprep.subr.bf16.mxu0 0
    %545 = vmatpush1.bf16.msra.mxu0 0
    %546 = vmatprep.subr.bf16.mxu0 0
    %547 = vmatpush1.bf16.msra.mxu0 0
    %548 = vmatprep.subr.bf16.mxu0 0
    %549 = vmatpush1.bf16.msra.mxu0 0
    %550 = vmatprep.subr.bf16.mxu0 0
    %551 = vmatpush1.bf16.msra.mxu0 0
    %552 = vmatprep.subr.bf16.mxu0 0
    %553 = vmatpush1.bf16.msra.mxu0 0
    %554 = vmatprep.subr.bf16.mxu0 0
    %555 = vmatpush1.bf16.msra.mxu0 0
    %556 = vmatprep.subr.bf16.mxu0 0
    %557 = vmatpush1.bf16.msra.mxu0 0
    %558 = vmatprep.mubr.bf16.mxu0 0
    %559 = vmatmul.mubr.bf16.gmra.mrb[0].mxu0 %v454
    %v560 = vpop.f32.mrb[0].mxu0
    %v561 = vadd.f32 %v476, %v560
    %v562 = vpop.f32.mrb[0].mxu0
    %v563 = vpop.f32.mrb[0].mxu0
    %v564 = vadd.f32 %v476, %v563
    %v565 = vpop.f32.mrb[0].mxu0
    %566 = vdwg.mxu0
    %567 = vst [vmem:[#allocation7] sm:$0xff] %v561
    %568 = vst [vmem:[#allocation7 + $0x8] sm:$0xff] %v564
    // Predicated region
    $region30: #{gemini_mlp_forward.1} parent=1 // pred_check
      _
    $region31: #{gemini_mlp_forward.1} parent=1 // pred_check_branch
      %570 = sbr.rel (0) target = $region33
    $region32: #{gemini_mlp_forward.1} parent=1 // pred_region
      %s572 = ssub.s32 256, 256
      %573 = vsyncadd [#allocation4], %s572
      %s574 = sshll.u32 [#allocation7], 4
      %s575 = int_to_ptr.vmem [resolvable:$true] %s574
      %580 = dma.vmem_to_hbm [thread:$0]  %s575, 256, %s5, [#allocation4], 128, 128, 8
    $region33: #{gemini_mlp_forward.1} parent=1 // pred_fallthru
      _
    // Predicated region
    $region34: #{gemini_mlp_forward.1} parent=1 // pred_check
      _
    $region35: #{gemini_mlp_forward.1} parent=1 // pred_check_branch
      %582 = sbr.rel (0) target = $region37
    $region36: #{gemini_mlp_forward.1} parent=1 // pred_region
      %583 = dma.done [#allocation4], 256
    $region37: #{gemini_mlp_forward.1} parent=1 // pred_fallthru
      _
    %584 = vsyncpa [#allocation3], 1
    %585 = vsyncpa [#allocation6], 1
    %586 = vsyncpa [#allocation4], 1

</llo_original>
